<compile_context>
chip_gen: v7x
topology: tpu7x:2x2x1
jax: 0.10.0
libtpu: 0.0.40
codegen_flags: <defaults>
</compile_context>

<pallas_src>
import functools

import jax
import jax.numpy as jnp
from jax.experimental import pallas as pl
from jax.experimental.pallas import tpu as pltpu


def _mlp_kernel(x_ref, w1_ref, b1_ref, w2_ref, b2_ref, w3_ref, b3_ref, o_ref):
    # fc1 + ReLU: bf16 MXU operands, f32 accumulation, f32 bias/ReLU.
    x = x_ref[...].astype(jnp.bfloat16)
    h = jnp.dot(x, w1_ref[...], preferred_element_type=jnp.float32)
    h = jnp.maximum(h + b1_ref[...], 0.0)
    # fc2 + ReLU (bf16 operands, f32 accumulate).
    h = jnp.dot(h.astype(jnp.bfloat16), w2_ref[...],
                preferred_element_type=jnp.float32)
    h = jnp.maximum(h + b2_ref[...], 0.0)
    # head (out_features == 1): VPU multiply + lane reduction instead of an
    # N=1 MXU matmul; small XLU transpose to a lane-dense (1, block_b) row.
    col = jnp.sum(h * w3_ref[...], axis=-1, keepdims=True)      # (block_b, 1)
    row = jnp.transpose(col) + b3_ref[...]                      # (1, block_b)
    o_ref[...] = row[None].astype(o_ref.dtype)                  # (1, 1, block_b)


def _round_up(n, m):
    return ((n + m - 1) // m) * m


@functools.partial(jax.jit, static_argnames=("block_b",))
def feedforward_regressor(x, params, *, block_b=None):
    """x: [B, input_size] float32 -> [B, 1] float32."""
    w1, b1, w2, b2, w3_row, b3 = params
    B, in_dim = x.shape
    hid = w1.shape[1]

    if block_b is None:
        # Large, MXU/lane-aligned batch tile (multiple of 256), capped at 8192
        # (fits v7x's 64 MiB VMEM with headroom); keep >= 2 tiles when B allows
        # so v7x's 2 TensorCores both get work.
        half = -(-B // 2)
        block_b = max(256, min(8192, _round_up(half, 256)))

    num_tiles = pl.cdiv(B, block_b)
    # No jnp.pad: Pallas handles the partial final x block. Rows past B read
    # unspecified data, but every row is independent and those outputs are
    # sliced off below, so no extra HBM copy of x is made.

    # Padded VMEM footprint: x tile lane-padded to 128 lanes, double-buffered,
    # plus f32/bf16 intermediates, output rows, resident weights + headroom.
    lane = 128
    vmem_bytes = (
        2 * block_b * lane * x.dtype.itemsize      # x tile, double-buffered
        + 4 * block_b * lane * 4                   # h intermediates (+bf16 copies)
        + 2 * block_b * 4                          # output rows, double-buffered
        + 4 * (in_dim * hid + hid * hid + 4 * hid) * 4  # weights / biases
    )
    vmem_bytes = int(min(vmem_bytes + (8 << 20), 48 << 20))  # headroom, v7x-safe cap

    full = lambda shape: pl.BlockSpec(shape, lambda i: (0, 0))  # VMEM-resident

    out = pl.pallas_call(
        _mlp_kernel,
        # Lane-dense output slab: one (1, block_b) row per grid step.
        out_shape=jax.ShapeDtypeStruct((num_tiles, 1, block_b), jnp.float32),
        grid_spec=pltpu.PrefetchScalarGridSpec(
            num_scalar_prefetch=0,
            grid=(num_tiles,),
            in_specs=[
                pl.BlockSpec((block_b, in_dim), lambda i: (i, 0)),  # x tile
                full((in_dim, hid)),                                # W1 (bf16, [in, out])
                full((1, hid)),                                     # b1 (f32)
                full((hid, hid)),                                   # W2 (bf16, [in, out])
                full((1, hid)),                                     # b2 (f32)
                full((1, hid)),                                     # W3 row (f32, head)
                full((1, 1)),                                       # b3 (f32)
            ],
            out_specs=pl.BlockSpec((1, 1, block_b), lambda i: (i, 0, 0)),
        ),
        compiler_params=pltpu.CompilerParams(
            dimension_semantics=("parallel",),
            vmem_limit_bytes=vmem_bytes,
        ),
    )(x, w1, b1, w2, b2, w3_row, b3)

    # (num_tiles, 1, block_b) -> (B, 1), dropping rows past B.
    return out.reshape(-1)[:B].reshape(B, 1)


def _xavier_uniform(key, fan_in, fan_out, shape):
    # torch.nn.init.xavier_uniform_: U(-a, a), a = sqrt(6 / (fan_in + fan_out))
    a = (6.0 / (fan_in + fan_out)) ** 0.5
    return jax.random.uniform(key, shape, jnp.float32, -a, a)


def _linear_bias(key, fan_in, shape):
    # torch.nn.Linear default bias init: U(-1/sqrt(fan_in), 1/sqrt(fan_in))
    bound = 1.0 / (fan_in ** 0.5)
    return jax.random.uniform(key, shape, jnp.float32, -bound, bound)


def init_params(key, input_size, hidden=64):
    k1, k2, k3, k4, k5, k6 = jax.random.split(key, 6)
    # fc1/fc2 stored transposed ([in, out]) and as bf16 (MXU operands);
    # biases + head weight stay f32 (used on the VPU / accumulation path).
    w1 = _xavier_uniform(k1, input_size, hidden, (input_size, hidden)).astype(jnp.bfloat16)
    b1 = _linear_bias(k2, input_size, (1, hidden))
    w2 = _xavier_uniform(k3, hidden, hidden, (hidden, hidden)).astype(jnp.bfloat16)
    b2 = _linear_bias(k4, hidden, (1, hidden))
    w3 = _xavier_uniform(k5, hidden, 1, (1, hidden))
    b3 = _linear_bias(k6, hidden, (1, 1))
    return (w1, b1, w2, b2, w3, b3)


def reference_bf16(x, params):
    """Mirrors the kernel's numerics (bf16 MXU operands, f32 accumulation)."""
    w1, b1, w2, b2, w3_row, b3 = params
    h = jnp.dot(x.astype(jnp.bfloat16), w1, preferred_element_type=jnp.float32)
    h = jnp.maximum(h + b1, 0.0)
    h = jnp.dot(h.astype(jnp.bfloat16), w2, preferred_element_type=jnp.float32)
    h = jnp.maximum(h + b2, 0.0)
    return jnp.sum(h * w3_row, axis=-1, keepdims=True) + b3


def reference_f32(x, params):
    """Pure f32 semantics of the PyTorch module (bf16 rounding ~1e-2 deviation)."""
    w1, b1, w2, b2, w3_row, b3 = params
    h = jnp.maximum(x @ w1.astype(jnp.float32) + b1, 0.0)
    h = jnp.maximum(h @ w2.astype(jnp.float32) + b2, 0.0)
    return h @ w3_row.T + b3


if __name__ == "__main__":
    key = jax.random.PRNGKey(0)
    k_x, k_x2, k_p = jax.random.split(key, 3)

    input_size = 32
    params = init_params(k_p, input_size)

    # Small batch (single 256-row tile, partial block read).
    x = jax.random.normal(k_x, (8, input_size), jnp.float32)
    out = jax.block_until_ready(feedforward_regressor(x, params))
    assert out.shape == (8, 1)
    assert jnp.allclose(out, reference_bf16(x, params), atol=1e-3, rtol=1e-3)
    assert jnp.allclose(out, reference_f32(x, params), atol=1e-1, rtol=1e-1)

    # Batch that is NOT a multiple of the tile size: 2 tiles, ragged last block,
    # exercising the no-pad partial-final-block path.
    x2 = jax.random.normal(k_x2, (300, input_size), jnp.float32)
    out2 = jax.block_until_ready(feedforward_regressor(x2, params))
    assert out2.shape == (300, 1)
    assert jnp.allclose(out2, reference_bf16(x2, params), atol=1e-3, rtol=1e-3)
    assert jnp.allclose(out2, reference_f32(x2, params), atol=1e-1, rtol=1e-1)

    print("KERNEL_OK")
</pallas_src>

<mosaic_0001>
module attributes {stable_mosaic.version = 11 : i64} {
  func.func @_mlp_kernel(%arg0: i32, %arg1: memref<256x32xf32, #tpu.memory_space<vmem>>, %arg2: memref<32x64xbf16, #tpu.memory_space<vmem>>, %arg3: memref<1x64xf32, #tpu.memory_space<vmem>>, %arg4: memref<64x64xbf16, #tpu.memory_space<vmem>>, %arg5: memref<1x64xf32, #tpu.memory_space<vmem>>, %arg6: memref<1x64xf32, #tpu.memory_space<vmem>>, %arg7: memref<1x1xf32, #tpu.memory_space<vmem>>, %arg8: memref<1x1x256xf32, #tpu.memory_space<vmem>>) attributes {dimension_semantics = [#tpu.dimension_semantics<parallel>], iteration_bounds = array<i64: 1>, scalar_prefetch = 0 : i64, scratch_operands = 0 : i64, tpu.core_type = #tpu.core_type<tc>, window_params = [{transform_indices = @transform_0, window_bounds = array<i64: 256, 32>}, {pipeline_mode = #tpu.pipeline_mode<synchronous>, transform_indices = @transform_1, window_bounds = array<i64: 32, 64>}, {pipeline_mode = #tpu.pipeline_mode<synchronous>, transform_indices = @transform_2, window_bounds = array<i64: 1, 64>}, {pipeline_mode = #tpu.pipeline_mode<synchronous>, transform_indices = @transform_3, window_bounds = array<i64: 64, 64>}, {pipeline_mode = #tpu.pipeline_mode<synchronous>, transform_indices = @transform_4, window_bounds = array<i64: 1, 64>}, {pipeline_mode = #tpu.pipeline_mode<synchronous>, transform_indices = @transform_5, window_bounds = array<i64: 1, 64>}, {pipeline_mode = #tpu.pipeline_mode<synchronous>, transform_indices = @transform_6, window_bounds = array<i64: 1, 1>}, {transform_indices = @transform_7, window_bounds = array<i64: 1, 1, 256>}]} {
    %c0 = arith.constant 0 : index
    %c0_0 = arith.constant 0 : index
    %0 = vector.load %arg1[%c0, %c0_0] : memref<256x32xf32, #tpu.memory_space<vmem>>, vector<256x32xf32>
    %1 = arith.truncf %0 : vector<256x32xf32> to vector<256x32xbf16>
    %c0_1 = arith.constant 0 : index
    %c0_2 = arith.constant 0 : index
    %2 = vector.load %arg2[%c0_1, %c0_2] : memref<32x64xbf16, #tpu.memory_space<vmem>>, vector<32x64xbf16>
    %cst = arith.constant dense<0.000000e+00> : vector<256x64xf32>
    %3 = tpu.matmul %1, %2, %cst {dimension_numbers = #tpu.dot_dimension_numbers<[1], [0], [0], [1], [0, 0, 1, 1], [], []>} : vector<256x32xbf16>, vector<32x64xbf16>, vector<256x64xf32> -> vector<256x64xf32>
    %c0_3 = arith.constant 0 : index
    %c0_4 = arith.constant 0 : index
    %4 = vector.load %arg3[%c0_3, %c0_4] : memref<1x64xf32, #tpu.memory_space<vmem>>, vector<1x64xf32>
    %5 = vector.broadcast %4 : vector<1x64xf32> to vector<256x64xf32>
    %6 = arith.addf %3, %5 : vector<256x64xf32>
    %cst_5 = arith.constant 0.000000e+00 : f32
    %7 = vector.broadcast %cst_5 : f32 to vector<256x64xf32>
    %8 = arith.maximumf %6, %7 : vector<256x64xf32>
    %9 = arith.truncf %8 : vector<256x64xf32> to vector<256x64xbf16>
    %c0_6 = arith.constant 0 : index
    %c0_7 = arith.constant 0 : index
    %10 = vector.load %arg4[%c0_6, %c0_7] : memref<64x64xbf16, #tpu.memory_space<vmem>>, vector<64x64xbf16>
    %cst_8 = arith.constant dense<0.000000e+00> : vector<256x64xf32>
    %11 = tpu.matmul %9, %10, %cst_8 {dimension_numbers = #tpu.dot_dimension_numbers<[1], [0], [0], [1], [0, 0, 1, 1], [], []>} : vector<256x64xbf16>, vector<64x64xbf16>, vector<256x64xf32> -> vector<256x64xf32>
    %c0_9 = arith.constant 0 : index
    %c0_10 = arith.constant 0 : index
    %12 = vector.load %arg5[%c0_9, %c0_10] : memref<1x64xf32, #tpu.memory_space<vmem>>, vector<1x64xf32>
    %13 = vector.broadcast %12 : vector<1x64xf32> to vector<256x64xf32>
    %14 = arith.addf %11, %13 : vector<256x64xf32>
    %cst_11 = arith.constant 0.000000e+00 : f32
    %15 = vector.broadcast %cst_11 : f32 to vector<256x64xf32>
    %16 = arith.maximumf %14, %15 : vector<256x64xf32>
    %c0_12 = arith.constant 0 : index
    %c0_13 = arith.constant 0 : index
    %17 = vector.load %arg6[%c0_12, %c0_13] : memref<1x64xf32, #tpu.memory_space<vmem>>, vector<1x64xf32>
    %18 = vector.broadcast %17 : vector<1x64xf32> to vector<256x64xf32>
    %19 = arith.mulf %16, %18 : vector<256x64xf32>
    %cst_14 = arith.constant dense<0.000000e+00> : vector<256xf32>
    %20 = vector.multi_reduction <add>, %19, %cst_14 [1] : vector<256x64xf32> to vector<256xf32>
    %21 = vector.shape_cast %20 : vector<256xf32> to vector<256x1xf32>
    %22 = tpu.transpose %21, [1, 0] : vector<256x1xf32> -> vector<1x256xf32>
    %c0_15 = arith.constant 0 : index
    %c0_16 = arith.constant 0 : index
    %23 = vector.load %arg7[%c0_15, %c0_16] : memref<1x1xf32, #tpu.memory_space<vmem>>, vector<1x1xf32>
    %24 = vector.broadcast %23 : vector<1x1xf32> to vector<1x256xf32>
    %25 = arith.addf %22, %24 : vector<1x256xf32>
    %26 = vector.shape_cast %25 : vector<1x256xf32> to vector<1x1x256xf32>
    %c0_17 = arith.constant 0 : index
    %c0_18 = arith.constant 0 : index
    %c0_19 = arith.constant 0 : index
    %27 = vector.load %arg8[%c0_17, %c0_18, %c0_19] : memref<1x1x256xf32, #tpu.memory_space<vmem>>, vector<1x1x256xf32>
    tpu.vector_store %arg8[%c0_17, %c0_18, %c0_19], %26 {strides = array<i32>} : memref<1x1x256xf32, #tpu.memory_space<vmem>>, vector<1x1x256xf32>,
    return
  }
  func.func @transform_0(%arg0: i32) -> (i32, i32) {
    %c0_i32 = arith.constant 0 : i32
    %c0_i32_0 = arith.constant 0 : i32
    return %arg0, %c0_i32 : i32, i32
  }
  func.func @transform_1(%arg0: i32) -> (i32, i32) {
    %c0_i32 = arith.constant 0 : i32
    %c0_i32_0 = arith.constant 0 : i32
    %c0_i32_1 = arith.constant 0 : i32
    return %c0_i32, %c0_i32_0 : i32, i32
  }
  func.func @transform_2(%arg0: i32) -> (i32, i32) {
    %c0_i32 = arith.constant 0 : i32
    %c0_i32_0 = arith.constant 0 : i32
    %c0_i32_1 = arith.constant 0 : i32
    return %c0_i32, %c0_i32_0 : i32, i32
  }
  func.func @transform_3(%arg0: i32) -> (i32, i32) {
    %c0_i32 = arith.constant 0 : i32
    %c0_i32_0 = arith.constant 0 : i32
    %c0_i32_1 = arith.constant 0 : i32
    return %c0_i32, %c0_i32_0 : i32, i32
  }
  func.func @transform_4(%arg0: i32) -> (i32, i32) {
    %c0_i32 = arith.constant 0 : i32
    %c0_i32_0 = arith.constant 0 : i32
    %c0_i32_1 = arith.constant 0 : i32
    return %c0_i32, %c0_i32_0 : i32, i32
  }
  func.func @transform_5(%arg0: i32) -> (i32, i32) {
    %c0_i32 = arith.constant 0 : i32
    %c0_i32_0 = arith.constant 0 : i32
    %c0_i32_1 = arith.constant 0 : i32
    return %c0_i32, %c0_i32_0 : i32, i32
  }
  func.func @transform_6(%arg0: i32) -> (i32, i32) {
    %c0_i32 = arith.constant 0 : i32
    %c0_i32_0 = arith.constant 0 : i32
    %c0_i32_1 = arith.constant 0 : i32
    return %c0_i32, %c0_i32_0 : i32, i32
  }
  func.func @transform_7(%arg0: i32) -> (i32, i32, i32) {
    %c0_i32 = arith.constant 0 : i32
    %c0_i32_0 = arith.constant 0 : i32
    %c0_i32_1 = arith.constant 0 : i32
    return %arg0, %c0_i32, %c0_i32_0 : i32, i32, i32
  }
}

</mosaic_0001>

<llo_original>
// kernel: feedforward_regressor.1
$region0: #{feedforward_regressor.1}
  #allocation0 [shape = 'u32[]', space=smem, size = 0x4, offset = 0x4, fixed_abs, tag = 'smem constant byte address 0x4 - core index']
  #allocation1 [shape = 'u32[144,128]{1,0:T(1,128)}', space=vmem, size = 0x12000, scoped, tag = 'internal scratch']
  #allocation2 [shape = 'f32[1,1]{1,0:T(1,128)S(1)}', space=vmem, size = 0x200, scoped, tag = 'scoped memory for feedforward_regressor.1']
  %s0 = inlined_call_operand.hbm [shape: f32[8,32], index: 0, kind: input, shape index: {}]
  %s1 = inlined_call_operand.hbm [shape: bf16[32,64], index: 1, kind: input, shape index: {}]
  %s2 = inlined_call_operand.vmem [shape: f32[1,64], index: 2, kind: input, shape index: {}]
  %s3 = inlined_call_operand.hbm [shape: bf16[64,64], index: 3, kind: input, shape index: {}]
  %s4 = inlined_call_operand.vmem [shape: f32[1,64], index: 4, kind: input, shape index: {}]
  %s5 = inlined_call_operand.vmem [shape: f32[1,64], index: 5, kind: input, shape index: {}]
  %s6 = inlined_call_operand.<no memory space> [shape: f32[1,1], index: 6, kind: input, shape index: {}]
  %s7 = inlined_call_operand.vmem [shape: f32[1,1,256], index: 7, kind: output, shape index: {}]
  %s8 = sld [smem:[#allocation0]]
  $region50: #{feedforward_regressor.1} parent=0
    _
  %s10 = ssub.s32 1, %s8
  %s11 = scalar_select 0, %s10, %s8
  %v12 = vstv %s6
  %13 = vst [vmem:[#allocation2] sm:$0x1] %v12
  $region1: #{feedforward_regressor.1} parent=0
    #allocation3 [shape = 'u8[131072]{0}', space=vmem, size = 0x20000, scoped, tag = 'input window, operand 0, single buffered']
    #allocation4 [shape = 's32[1]{0}', space=sflag, size = 0x4, scoped, tag = 'scoped memory for feedforward_regressor.1']
    #allocation5 [shape = 'u8[8192]{0}', space=vmem, size = 0x2000, scoped, tag = 'input window, operand 1, single buffered']
    #allocation6 [shape = 's32[1]{0}', space=sflag, size = 0x4, scoped, tag = 'scoped memory for feedforward_regressor.1']
    #allocation7 [shape = 'u8[16384]{0}', space=vmem, size = 0x4000, scoped, tag = 'input window, operand 3, single buffered']
    %14 = vsyncpa [#allocation4], 0
    %15 = vsyncpa [#allocation6], 0
    // Predicated region
    $region2: #{feedforward_regressor.1} parent=1 // pred_check
      _
    $region3: #{feedforward_regressor.1} parent=1 // pred_check_branch
      %17 = sbr.rel (0) target = $region5
    $region4: #{feedforward_regressor.1} parent=1 // pred_region
      %s19 = ssub.s32 4096, 128
      %20 = vsyncadd [#allocation4], %s19
      %s21 = sshll.u32 [#allocation3], 4
      %s22 = int_to_ptr.vmem [resolvable:$true] %s21
      %27 = dma.hbm_to_vmem [thread:$0]  %s0, 128, %s22, [#allocation4], 128, 128, 8
    $region5: #{feedforward_regressor.1} parent=1 // pred_fallthru
      _
    // Predicated region
    $region6: #{feedforward_regressor.1} parent=1 // pred_check
      _
    $region7: #{feedforward_regressor.1} parent=1 // pred_check_branch
      %29 = sbr.rel (0) target = $region9
    $region8: #{feedforward_regressor.1} parent=1 // pred_region
      %s31 = ssub.s32 256, 256
      %32 = vsyncadd [#allocation6], %s31
      %s33 = sshll.u32 [#allocation5], 4
      %s34 = int_to_ptr.vmem [resolvable:$true] %s33
      %39 = dma.hbm_to_vmem [thread:$0]  %s1, 256, %s34, [#allocation6], 64, 64, 4
    $region9: #{feedforward_regressor.1} parent=1 // pred_fallthru
      _
    // Predicated region
    $region10: #{feedforward_regressor.1} parent=1 // pred_check
      _
    $region11: #{feedforward_regressor.1} parent=1 // pred_check_branch
      %41 = sbr.rel (0) target = $region13
    $region12: #{feedforward_regressor.1} parent=1 // pred_region
      _
    $region13: #{feedforward_regressor.1} parent=1 // pred_fallthru
      _
    // Predicated region
    $region14: #{feedforward_regressor.1} parent=1 // pred_check
      _
    $region15: #{feedforward_regressor.1} parent=1 // pred_check_branch
      %43 = sbr.rel (0) target = $region17
    $region16: #{feedforward_regressor.1} parent=1 // pred_region
      %s45 = ssub.s32 512, 512
      %46 = vsyncadd [#allocation6], %s45
      %s47 = sshll.u32 [#allocation7], 4
      %s48 = int_to_ptr.vmem [resolvable:$true] %s47
      %53 = dma.hbm_to_vmem [thread:$0]  %s3, 512, %s48, [#allocation6], 64, 64, 4
    $region17: #{feedforward_regressor.1} parent=1 // pred_fallthru
      _
    // Predicated region
    $region18: #{feedforward_regressor.1} parent=1 // pred_check
      _
    $region19: #{feedforward_regressor.1} parent=1 // pred_check_branch
      %55 = sbr.rel (0) target = $region21
    $region20: #{feedforward_regressor.1} parent=1 // pred_region
      _
    $region21: #{feedforward_regressor.1} parent=1 // pred_fallthru
      _
    // Predicated region
    $region22: #{feedforward_regressor.1} parent=1 // pred_check
      _
    $region23: #{feedforward_regressor.1} parent=1 // pred_check_branch
      %57 = sbr.rel (0) target = $region25
    $region24: #{feedforward_regressor.1} parent=1 // pred_region
      _
    $region25: #{feedforward_regressor.1} parent=1 // pred_fallthru
      _
    // Predicated region
    $region26: #{feedforward_regressor.1} parent=1 // pred_check
      _
    $region27: #{feedforward_regressor.1} parent=1 // pred_check_branch
      %59 = sbr.rel (0) target = $region29
    $region28: #{feedforward_regressor.1} parent=1 // pred_region
      _
    $region29: #{feedforward_regressor.1} parent=1 // pred_fallthru
      _
    // Predicated region
    $region30: #{feedforward_regressor.1} parent=1 // pred_check
      _
    $region31: #{feedforward_regressor.1} parent=1 // pred_check_branch
      %61 = sbr.rel (0) target = $region33
    $region32: #{feedforward_regressor.1} parent=1 // pred_region
      %62 = dma.done [#allocation4], 4096
    $region33: #{feedforward_regressor.1} parent=1 // pred_fallthru
      _
    // Predicated region
    $region34: #{feedforward_regressor.1} parent=1 // pred_check
      _
    $region35: #{feedforward_regressor.1} parent=1 // pred_check_branch
      %64 = sbr.rel (0) target = $region37
    $region36: #{feedforward_regressor.1} parent=1 // pred_region
      %65 = dma.done [#allocation6], 256
    $region37: #{feedforward_regressor.1} parent=1 // pred_fallthru
      _
    // Predicated region
    $region38: #{feedforward_regressor.1} parent=1 // pred_check
      _
    $region39: #{feedforward_regressor.1} parent=1 // pred_check_branch
      %67 = sbr.rel (0) target = $region41
    $region40: #{feedforward_regressor.1} parent=1 // pred_region
      %68 = dma.done [#allocation6], 512
    $region41: #{feedforward_regressor.1} parent=1 // pred_fallthru
      _
    %v70 = vld [vmem:[#allocation3] sm:$0xff]
    %v71 = vld [vmem:[#allocation3 + $0x8] sm:$0xff]
    %v72 = vld [vmem:[#allocation3 + $0x10] sm:$0xff]
    %v73 = vld [vmem:[#allocation3 + $0x18] sm:$0xff]
    %v74 = vld [vmem:[#allocation3 + $0x20] sm:$0xff]
    %v75 = vld [vmem:[#allocation3 + $0x28] sm:$0xff]
    %v76 = vld [vmem:[#allocation3 + $0x30] sm:$0xff]
    %v77 = vld [vmem:[#allocation3 + $0x38] sm:$0xff]
    %v78 = vld [vmem:[#allocation3 + $0x40] sm:$0xff]
    %v79 = vld [vmem:[#allocation3 + $0x48] sm:$0xff]
    %v80 = vld [vmem:[#allocation3 + $0x50] sm:$0xff]
    %v81 = vld [vmem:[#allocation3 + $0x58] sm:$0xff]
    %v82 = vld [vmem:[#allocation3 + $0x60] sm:$0xff]
    %v83 = vld [vmem:[#allocation3 + $0x68] sm:$0xff]
    %v84 = vld [vmem:[#allocation3 + $0x70] sm:$0xff]
    %v85 = vld [vmem:[#allocation3 + $0x78] sm:$0xff]
    %v86 = vld [vmem:[#allocation3 + $0x80] sm:$0xff]
    %v87 = vld [vmem:[#allocation3 + $0x88] sm:$0xff]
    %v88 = vld [vmem:[#allocation3 + $0x90] sm:$0xff]
    %v89 = vld [vmem:[#allocation3 + $0x98] sm:$0xff]
    %v90 = vld [vmem:[#allocation3 + $0xa0] sm:$0xff]
    %v91 = vld [vmem:[#allocation3 + $0xa8] sm:$0xff]
    %v92 = vld [vmem:[#allocation3 + $0xb0] sm:$0xff]
    %v93 = vld [vmem:[#allocation3 + $0xb8] sm:$0xff]
    %v94 = vld [vmem:[#allocation3 + $0xc0] sm:$0xff]
    %v95 = vld [vmem:[#allocation3 + $0xc8] sm:$0xff]
    %v96 = vld [vmem:[#allocation3 + $0xd0] sm:$0xff]
    %v97 = vld [vmem:[#allocation3 + $0xd8] sm:$0xff]
    %v98 = vld [vmem:[#allocation3 + $0xe0] sm:$0xff]
    %v99 = vld [vmem:[#allocation3 + $0xe8] sm:$0xff]
    %v100 = vld [vmem:[#allocation3 + $0xf0] sm:$0xff]
    %v101 = vld [vmem:[#allocation3 + $0xf8] sm:$0xff]
    %v102 = vpack.c.bf16 %v71, %v70
    %v103 = vpack.c.bf16 %v73, %v72
    %v104 = vpack.c.bf16 %v75, %v74
    %v105 = vpack.c.bf16 %v77, %v76
    %v106 = vpack.c.bf16 %v79, %v78
    %v107 = vpack.c.bf16 %v81, %v80
    %v108 = vpack.c.bf16 %v83, %v82
    %v109 = vpack.c.bf16 %v85, %v84
    %v110 = vpack.c.bf16 %v87, %v86
    %v111 = vpack.c.bf16 %v89, %v88
    %v112 = vpack.c.bf16 %v91, %v90
    %v113 = vpack.c.bf16 %v93, %v92
    %v114 = vpack.c.bf16 %v95, %v94
    %v115 = vpack.c.bf16 %v97, %v96
    %v116 = vpack.c.bf16 %v99, %v98
    %v117 = vpack.c.bf16 %v101, %v100
    %v118 = vld [vmem:[#allocation5] sm:$0xf]
    %v119 = vld [vmem:[#allocation5 + $0x4] sm:$0xf]
    %v120 = vld [vmem:[#allocation5 + $0x8] sm:$0xf]
    %v121 = vld [vmem:[#allocation5 + $0xc] sm:$0xf]
    %v122 = vld [vmem:[%s2] sm:$0x1]
    %v124 = vlaneseq
    %v125 = vshrl.u32 %v124, 7
    %v126 = vsub.s32 0, %v125
    %v127 = vrot.slane %v122, %v126
    %v133 = vunpack.c.l.b16 %v118
    %v134 = vunpack.c.l.b16 %v119
    %v135 = vunpack.c.l.b16 %v120
    %v136 = vunpack.c.l.b16 %v121
    %v137 = vpack.c.b16 %v134, %v133
    %v138 = vpack.c.b16 %v136, %v135
    %vm141 = vcmask 261120
    %v143 = vsel %vm141, %v102, 0
    %v146 = vsel %vm141, %v103, 0
    %v149 = vsel %vm141, %v104, 0
    %v152 = vsel %vm141, %v105, 0
    %v155 = vsel %vm141, %v106, 0
    %v158 = vsel %vm141, %v107, 0
    %v161 = vsel %vm141, %v108, 0
    %v164 = vsel %vm141, %v109, 0
    %v167 = vsel %vm141, %v110, 0
    %v170 = vsel %vm141, %v111, 0
    %v173 = vsel %vm141, %v112, 0
    %v176 = vsel %vm141, %v113, 0
    %v179 = vsel %vm141, %v114, 0
    %v182 = vsel %vm141, %v115, 0
    %v185 = vsel %vm141, %v116, 0
    %v188 = vsel %vm141, %v117, 0
    %190 = vmatprep.subr.bf16.mxu0 0
    %191 = vmatpush1.bf16.msra.mxu0 %v137
    %192 = vmatprep.subr.bf16.mxu0 0
    %193 = vmatpush1.bf16.msra.mxu0 %v138
    %194 = vmatprep.subr.bf16.mxu0 0
    %195 = vmatpush1.bf16.msra.mxu0 0
    %196 = vmatprep.subr.bf16.mxu0 0
    %197 = vmatpush1.bf16.msra.mxu0 0
    %198 = vmatprep.subr.bf16.mxu0 0
    %199 = vmatpush1.bf16.msra.mxu0 0
    %200 = vmatprep.subr.bf16.mxu0 0
    %201 = vmatpush1.bf16.msra.mxu0 0
    %202 = vmatprep.subr.bf16.mxu0 0
    %203 = vmatpush1.bf16.msra.mxu0 0
    %204 = vmatprep.subr.bf16.mxu0 0
    %205 = vmatpush1.bf16.msra.mxu0 0
    %206 = vmatprep.subr.bf16.mxu0 0
    %207 = vmatpush1.bf16.msra.mxu0 0
    %208 = vmatprep.subr.bf16.mxu0 0
    %209 = vmatpush1.bf16.msra.mxu0 0
    %210 = vmatprep.subr.bf16.mxu0 0
    %211 = vmatpush1.bf16.msra.mxu0 0
    %212 = vmatprep.subr.bf16.mxu0 0
    %213 = vmatpush1.bf16.msra.mxu0 0
    %214 = vmatprep.subr.bf16.mxu0 0
    %215 = vmatpush1.bf16.msra.mxu0 0
    %216 = vmatprep.subr.bf16.mxu0 0
    %217 = vmatpush1.bf16.msra.mxu0 0
    %218 = vmatprep.subr.bf16.mxu0 0
    %219 = vmatpush1.bf16.msra.mxu0 0
    %220 = vmatprep.subr.bf16.mxu0 0
    %221 = vmatpush1.bf16.msra.mxu0 0
    %222 = vmatprep.mubr.bf16.mxu0 0
    %223 = vmatmul.mubr.bf16.gmra.mrb[0].mxu0 %v143
    %v224 = vpop.f32.mrb[0].mxu0
    %v225 = vadd.f32 %v127, %v224
    %v226 = vpop.f32.mrb[0].mxu0
    %v227 = vpop.f32.mrb[0].mxu0
    %v228 = vadd.f32 %v127, %v227
    %v229 = vpop.f32.mrb[0].mxu0
    %230 = vmatprep.mubr.bf16.mxu0 0
    %231 = vmatmul.mubr.bf16.gmra.mrb[0].mxu0 %v146
    %v232 = vpop.f32.mrb[0].mxu0
    %v233 = vadd.f32 %v127, %v232
    %v234 = vpop.f32.mrb[0].mxu0
    %v235 = vpop.f32.mrb[0].mxu0
    %v236 = vadd.f32 %v127, %v235
    %v237 = vpop.f32.mrb[0].mxu0
    %238 = vmatprep.mubr.bf16.mxu0 0
    %239 = vmatmul.mubr.bf16.gmra.mrb[0].mxu0 %v149
    %v240 = vpop.f32.mrb[0].mxu0
    %v241 = vadd.f32 %v127, %v240
    %v242 = vpop.f32.mrb[0].mxu0
    %v243 = vpop.f32.mrb[0].mxu0
    %v244 = vadd.f32 %v127, %v243
    %v245 = vpop.f32.mrb[0].mxu0
    %246 = vmatprep.mubr.bf16.mxu0 0
    %247 = vmatmul.mubr.bf16.gmra.mrb[0].mxu0 %v152
    %v248 = vpop.f32.mrb[0].mxu0
    %v249 = vadd.f32 %v127, %v248
    %v250 = vpop.f32.mrb[0].mxu0
    %v251 = vpop.f32.mrb[0].mxu0
    %v252 = vadd.f32 %v127, %v251
    %v253 = vpop.f32.mrb[0].mxu0
    %254 = vmatprep.mubr.bf16.mxu0 0
    %255 = vmatmul.mubr.bf16.gmra.mrb[0].mxu0 %v155
    %v256 = vpop.f32.mrb[0].mxu0
    %v257 = vadd.f32 %v127, %v256
    %v258 = vpop.f32.mrb[0].mxu0
    %v259 = vpop.f32.mrb[0].mxu0
    %v260 = vadd.f32 %v127, %v259
    %v261 = vpop.f32.mrb[0].mxu0
    %262 = vmatprep.mubr.bf16.mxu0 0
    %263 = vmatmul.mubr.bf16.gmra.mrb[0].mxu0 %v158
    %v264 = vpop.f32.mrb[0].mxu0
    %v265 = vadd.f32 %v127, %v264
    %v266 = vpop.f32.mrb[0].mxu0
    %v267 = vpop.f32.mrb[0].mxu0
    %v268 = vadd.f32 %v127, %v267
    %v269 = vpop.f32.mrb[0].mxu0
    %270 = vmatprep.mubr.bf16.mxu0 0
    %271 = vmatmul.mubr.bf16.gmra.mrb[0].mxu0 %v161
    %v272 = vpop.f32.mrb[0].mxu0
    %v273 = vadd.f32 %v127, %v272
    %v274 = vpop.f32.mrb[0].mxu0
    %v275 = vpop.f32.mrb[0].mxu0
    %v276 = vadd.f32 %v127, %v275
    %v277 = vpop.f32.mrb[0].mxu0
    %278 = vmatprep.mubr.bf16.mxu0 0
    %279 = vmatmul.mubr.bf16.gmra.mrb[0].mxu0 %v164
    %v280 = vpop.f32.mrb[0].mxu0
    %v281 = vadd.f32 %v127, %v280
    %v282 = vpop.f32.mrb[0].mxu0
    %v283 = vpop.f32.mrb[0].mxu0
    %v284 = vadd.f32 %v127, %v283
    %v285 = vpop.f32.mrb[0].mxu0
    %286 = vmatprep.mubr.bf16.mxu0 0
    %287 = vmatmul.mubr.bf16.gmra.mrb[0].mxu0 %v167
    %v288 = vpop.f32.mrb[0].mxu0
    %v289 = vadd.f32 %v127, %v288
    %v290 = vpop.f32.mrb[0].mxu0
    %v291 = vpop.f32.mrb[0].mxu0
    %v292 = vadd.f32 %v127, %v291
    %v293 = vpop.f32.mrb[0].mxu0
    %294 = vmatprep.mubr.bf16.mxu0 0
    %295 = vmatmul.mubr.bf16.gmra.mrb[0].mxu0 %v170
    %v296 = vpop.f32.mrb[0].mxu0
    %v297 = vadd.f32 %v127, %v296
    %v298 = vpop.f32.mrb[0].mxu0
    %v299 = vpop.f32.mrb[0].mxu0
    %v300 = vadd.f32 %v127, %v299
    %v301 = vpop.f32.mrb[0].mxu0
    %302 = vmatprep.mubr.bf16.mxu0 0
    %303 = vmatmul.mubr.bf16.gmra.mrb[0].mxu0 %v173
    %v304 = vpop.f32.mrb[0].mxu0
    %v305 = vadd.f32 %v127, %v304
    %v306 = vpop.f32.mrb[0].mxu0
    %v307 = vpop.f32.mrb[0].mxu0
    %v308 = vadd.f32 %v127, %v307
    %v309 = vpop.f32.mrb[0].mxu0
    %310 = vmatprep.mubr.bf16.mxu0 0
    %311 = vmatmul.mubr.bf16.gmra.mrb[0].mxu0 %v176
    %v312 = vpop.f32.mrb[0].mxu0
    %v313 = vadd.f32 %v127, %v312
    %v314 = vpop.f32.mrb[0].mxu0
    %v315 = vpop.f32.mrb[0].mxu0
    %v316 = vadd.f32 %v127, %v315
    %v317 = vpop.f32.mrb[0].mxu0
    %318 = vmatprep.mubr.bf16.mxu0 0
    %319 = vmatmul.mubr.bf16.gmra.mrb[0].mxu0 %v179
    %v320 = vpop.f32.mrb[0].mxu0
    %v321 = vadd.f32 %v127, %v320
    %v322 = vpop.f32.mrb[0].mxu0
    %v323 = vpop.f32.mrb[0].mxu0
    %v324 = vadd.f32 %v127, %v323
    %v325 = vpop.f32.mrb[0].mxu0
    %326 = vmatprep.mubr.bf16.mxu0 0
    %327 = vmatmul.mubr.bf16.gmra.mrb[0].mxu0 %v182
    %v328 = vpop.f32.mrb[0].mxu0
    %v329 = vadd.f32 %v127, %v328
    %v330 = vpop.f32.mrb[0].mxu0
    %v331 = vpop.f32.mrb[0].mxu0
    %v332 = vadd.f32 %v127, %v331
    %v333 = vpop.f32.mrb[0].mxu0
    %334 = vmatprep.mubr.bf16.mxu0 0
    %335 = vmatmul.mubr.bf16.gmra.mrb[0].mxu0 %v185
    %v336 = vpop.f32.mrb[0].mxu0
    %v337 = vadd.f32 %v127, %v336
    %v338 = vpop.f32.mrb[0].mxu0
    %v339 = vpop.f32.mrb[0].mxu0
    %v340 = vadd.f32 %v127, %v339
    %v341 = vpop.f32.mrb[0].mxu0
    %342 = vmatprep.mubr.bf16.mxu0 0
    %343 = vmatmul.mubr.bf16.gmra.mrb[0].mxu0 %v188
    %v344 = vpop.f32.mrb[0].mxu0
    %v345 = vadd.f32 %v127, %v344
    %v346 = vpop.f32.mrb[0].mxu0
    %v347 = vpop.f32.mrb[0].mxu0
    %v348 = vadd.f32 %v127, %v347
    %v349 = vpop.f32.mrb[0].mxu0
    %350 = vdwg.mxu0
    %v351 = vmax.f32 %v225, 0.0
    %v352 = vmax.f32 %v228, 0.0
    %v353 = vmax.f32 %v233, 0.0
    %v354 = vmax.f32 %v236, 0.0
    %v355 = vmax.f32 %v241, 0.0
    %v356 = vmax.f32 %v244, 0.0
    %v357 = vmax.f32 %v249, 0.0
    %v358 = vmax.f32 %v252, 0.0
    %v359 = vmax.f32 %v257, 0.0
    %v360 = vmax.f32 %v260, 0.0
    %v361 = vmax.f32 %v265, 0.0
    %v362 = vmax.f32 %v268, 0.0
    %v363 = vmax.f32 %v273, 0.0
    %v364 = vmax.f32 %v276, 0.0
    %v365 = vmax.f32 %v281, 0.0
    %v366 = vmax.f32 %v284, 0.0
    %v367 = vmax.f32 %v289, 0.0
    %v368 = vmax.f32 %v292, 0.0
    %v369 = vmax.f32 %v297, 0.0
    %v370 = vmax.f32 %v300, 0.0
    %v371 = vmax.f32 %v305, 0.0
    %v372 = vmax.f32 %v308, 0.0
    %v373 = vmax.f32 %v313, 0.0
    %v374 = vmax.f32 %v316, 0.0
    %v375 = vmax.f32 %v321, 0.0
    %v376 = vmax.f32 %v324, 0.0
    %v377 = vmax.f32 %v329, 0.0
    %v378 = vmax.f32 %v332, 0.0
    %v379 = vmax.f32 %v337, 0.0
    %v380 = vmax.f32 %v340, 0.0
    %v381 = vmax.f32 %v345, 0.0
    %v382 = vmax.f32 %v348, 0.0
    %v383 = vpack.c.bf16 %v352, %v351
    %v384 = vpack.c.bf16 %v354, %v353
    %v385 = vpack.c.bf16 %v356, %v355
    %v386 = vpack.c.bf16 %v358, %v357
    %v387 = vpack.c.bf16 %v360, %v359
    %v388 = vpack.c.bf16 %v362, %v361
    %v389 = vpack.c.bf16 %v364, %v363
    %v390 = vpack.c.bf16 %v366, %v365
    %v391 = vpack.c.bf16 %v368, %v367
    %v392 = vpack.c.bf16 %v370, %v369
    %v393 = vpack.c.bf16 %v372, %v371
    %v394 = vpack.c.bf16 %v374, %v373
    %v395 = vpack.c.bf16 %v376, %v375
    %v396 = vpack.c.bf16 %v378, %v377
    %v397 = vpack.c.bf16 %v380, %v379
    %v398 = vpack.c.bf16 %v382, %v381
    %v399 = vld [vmem:[#allocation7] sm:$0xf]
    %v400 = vld [vmem:[#allocation7 + $0x4] sm:$0xf]
    %v401 = vld [vmem:[#allocation7 + $0x8] sm:$0xf]
    %v402 = vld [vmem:[#allocation7 + $0xc] sm:$0xf]
    %v403 = vld [vmem:[#allocation7 + $0x10] sm:$0xf]
    %v404 = vld [vmem:[#allocation7 + $0x14] sm:$0xf]
    %v405 = vld [vmem:[#allocation7 + $0x18] sm:$0xf]
    %v406 = vld [vmem:[#allocation7 + $0x1c] sm:$0xf]
    %v407 = vld [vmem:[%s4] sm:$0x1]
    %v409 = vlaneseq
    %v410 = vshrl.u32 %v409, 7
    %v411 = vsub.s32 0, %v410
    %v412 = vrot.slane %v407, %v411
    %v422 = vunpack.c.l.b16 %v399
    %v423 = vunpack.c.l.b16 %v400
    %v424 = vunpack.c.l.b16 %v401
    %v425 = vunpack.c.l.b16 %v402
    %v426 = vunpack.c.l.b16 %v403
    %v427 = vunpack.c.l.b16 %v404
    %v428 = vunpack.c.l.b16 %v405
    %v429 = vunpack.c.l.b16 %v406
    %v430 = vpack.c.b16 %v423, %v422
    %v431 = vpack.c.b16 %v425, %v424
    %v432 = vpack.c.b16 %v427, %v426
    %v433 = vpack.c.b16 %v429, %v428
    %vm438 = vcmask 523264
    %v440 = vsel %vm438, %v383, 0
    %v443 = vsel %vm438, %v384, 0
    %v446 = vsel %vm438, %v385, 0
    %v449 = vsel %vm438, %v386, 0
    %v452 = vsel %vm438, %v387, 0
    %v455 = vsel %vm438, %v388, 0
    %v458 = vsel %vm438, %v389, 0
    %v461 = vsel %vm438, %v390, 0
    %v464 = vsel %vm438, %v391, 0
    %v467 = vsel %vm438, %v392, 0
    %v470 = vsel %vm438, %v393, 0
    %v473 = vsel %vm438, %v394, 0
    %v476 = vsel %vm438, %v395, 0
    %v479 = vsel %vm438, %v396, 0
    %v482 = vsel %vm438, %v397, 0
    %v485 = vsel %vm438, %v398, 0
    %487 = vmatprep.subr.bf16.mxu0 0
    %488 = vmatpush1.bf16.msra.mxu0 %v430
    %489 = vmatprep.subr.bf16.mxu0 0
    %490 = vmatpush1.bf16.msra.mxu0 %v431
    %491 = vmatprep.subr.bf16.mxu0 0
    %492 = vmatpush1.bf16.msra.mxu0 %v432
    %493 = vmatprep.subr.bf16.mxu0 0
    %494 = vmatpush1.bf16.msra.mxu0 %v433
    %495 = vmatprep.subr.bf16.mxu0 0
    %496 = vmatpush1.bf16.msra.mxu0 0
    %497 = vmatprep.subr.bf16.mxu0 0
    %498 = vmatpush1.bf16.msra.mxu0 0
    %499 = vmatprep.subr.bf16.mxu0 0
    %500 = vmatpush1.bf16.msra.mxu0 0
    %501 = vmatprep.subr.bf16.mxu0 0
    %502 = vmatpush1.bf16.msra.mxu0 0
    %503 = vmatprep.subr.bf16.mxu0 0
    %504 = vmatpush1.bf16.msra.mxu0 0
    %505 = vmatprep.subr.bf16.mxu0 0
    %506 = vmatpush1.bf16.msra.mxu0 0
    %507 = vmatprep.subr.bf16.mxu0 0
    %508 = vmatpush1.bf16.msra.mxu0 0
    %509 = vmatprep.subr.bf16.mxu0 0
    %510 = vmatpush1.bf16.msra.mxu0 0
    %511 = vmatprep.subr.bf16.mxu0 0
    %512 = vmatpush1.bf16.msra.mxu0 0
    %513 = vmatprep.subr.bf16.mxu0 0
    %514 = vmatpush1.bf16.msra.mxu0 0
    %515 = vmatprep.subr.bf16.mxu0 0
    %516 = vmatpush1.bf16.msra.mxu0 0
    %517 = vmatprep.subr.bf16.mxu0 0
    %518 = vmatpush1.bf16.msra.mxu0 0
    %519 = vmatprep.mubr.bf16.mxu0 0
    %520 = vmatmul.mubr.bf16.gmra.mrb[0].mxu0 %v440
    %v521 = vpop.f32.mrb[0].mxu0
    %v522 = vadd.f32 %v412, %v521
    %v523 = vpop.f32.mrb[0].mxu0
    %v524 = vpop.f32.mrb[0].mxu0
    %v525 = vadd.f32 %v412, %v524
    %v526 = vpop.f32.mrb[0].mxu0
    %527 = vmatprep.mubr.bf16.mxu0 0
    %528 = vmatmul.mubr.bf16.gmra.mrb[0].mxu0 %v443
    %v529 = vpop.f32.mrb[0].mxu0
    %v530 = vadd.f32 %v412, %v529
    %v531 = vpop.f32.mrb[0].mxu0
    %v532 = vpop.f32.mrb[0].mxu0
    %v533 = vadd.f32 %v412, %v532
    %v534 = vpop.f32.mrb[0].mxu0
    %535 = vmatprep.mubr.bf16.mxu0 0
    %536 = vmatmul.mubr.bf16.gmra.mrb[0].mxu0 %v446
    %v537 = vpop.f32.mrb[0].mxu0
    %v538 = vadd.f32 %v412, %v537
    %v539 = vpop.f32.mrb[0].mxu0
    %v540 = vpop.f32.mrb[0].mxu0
    %v541 = vadd.f32 %v412, %v540
    %v542 = vpop.f32.mrb[0].mxu0
    %543 = vmatprep.mubr.bf16.mxu0 0
    %544 = vmatmul.mubr.bf16.gmra.mrb[0].mxu0 %v449
    %v545 = vpop.f32.mrb[0].mxu0
    %v546 = vadd.f32 %v412, %v545
    %v547 = vpop.f32.mrb[0].mxu0
    %v548 = vpop.f32.mrb[0].mxu0
    %v549 = vadd.f32 %v412, %v548
    %v550 = vpop.f32.mrb[0].mxu0
    %551 = vmatprep.mubr.bf16.mxu0 0
    %552 = vmatmul.mubr.bf16.gmra.mrb[0].mxu0 %v452
    %v553 = vpop.f32.mrb[0].mxu0
    %v554 = vadd.f32 %v412, %v553
    %v555 = vpop.f32.mrb[0].mxu0
    %v556 = vpop.f32.mrb[0].mxu0
    %v557 = vadd.f32 %v412, %v556
    %v558 = vpop.f32.mrb[0].mxu0
    %559 = vmatprep.mubr.bf16.mxu0 0
    %560 = vmatmul.mubr.bf16.gmra.mrb[0].mxu0 %v455
    %v561 = vpop.f32.mrb[0].mxu0
    %v562 = vadd.f32 %v412, %v561
    %v563 = vpop.f32.mrb[0].mxu0
    %v564 = vpop.f32.mrb[0].mxu0
    %v565 = vadd.f32 %v412, %v564
    %v566 = vpop.f32.mrb[0].mxu0
    %567 = vmatprep.mubr.bf16.mxu0 0
    %568 = vmatmul.mubr.bf16.gmra.mrb[0].mxu0 %v458
    %v569 = vpop.f32.mrb[0].mxu0
    %v570 = vadd.f32 %v412, %v569
    %v571 = vpop.f32.mrb[0].mxu0
    %v572 = vpop.f32.mrb[0].mxu0
    %v573 = vadd.f32 %v412, %v572
    %v574 = vpop.f32.mrb[0].mxu0
    %575 = vmatprep.mubr.bf16.mxu0 0
    %576 = vmatmul.mubr.bf16.gmra.mrb[0].mxu0 %v461
    %v577 = vpop.f32.mrb[0].mxu0
    %v578 = vadd.f32 %v412, %v577
    %v579 = vpop.f32.mrb[0].mxu0
    %v580 = vpop.f32.mrb[0].mxu0
    %v581 = vadd.f32 %v412, %v580
    %v582 = vpop.f32.mrb[0].mxu0
    %583 = vmatprep.mubr.bf16.mxu0 0
    %584 = vmatmul.mubr.bf16.gmra.mrb[0].mxu0 %v464
    %v585 = vpop.f32.mrb[0].mxu0
    %v586 = vadd.f32 %v412, %v585
    %v587 = vpop.f32.mrb[0].mxu0
    %v588 = vpop.f32.mrb[0].mxu0
    %v589 = vadd.f32 %v412, %v588
    %v590 = vpop.f32.mrb[0].mxu0
    %591 = vmatprep.mubr.bf16.mxu0 0
    %592 = vmatmul.mubr.bf16.gmra.mrb[0].mxu0 %v467
    %v593 = vpop.f32.mrb[0].mxu0
    %v594 = vadd.f32 %v412, %v593
    %v595 = vpop.f32.mrb[0].mxu0
    %v596 = vpop.f32.mrb[0].mxu0
    %v597 = vadd.f32 %v412, %v596
    %v598 = vpop.f32.mrb[0].mxu0
    %599 = vmatprep.mubr.bf16.mxu0 0
    %600 = vmatmul.mubr.bf16.gmra.mrb[0].mxu0 %v470
    %v601 = vpop.f32.mrb[0].mxu0
    %v602 = vadd.f32 %v412, %v601
    %v603 = vpop.f32.mrb[0].mxu0
    %v604 = vpop.f32.mrb[0].mxu0
    %v605 = vadd.f32 %v412, %v604
    %v606 = vpop.f32.mrb[0].mxu0
    %607 = vmatprep.mubr.bf16.mxu0 0
    %608 = vmatmul.mubr.bf16.gmra.mrb[0].mxu0 %v473
    %v609 = vpop.f32.mrb[0].mxu0
    %v610 = vadd.f32 %v412, %v609
    %v611 = vpop.f32.mrb[0].mxu0
    %v612 = vpop.f32.mrb[0].mxu0
    %v613 = vadd.f32 %v412, %v612
    %v614 = vpop.f32.mrb[0].mxu0
    %615 = vmatprep.mubr.bf16.mxu0 0
    %616 = vmatmul.mubr.bf16.gmra.mrb[0].mxu0 %v476
    %v617 = vpop.f32.mrb[0].mxu0
    %v618 = vadd.f32 %v412, %v617
    %v619 = vpop.f32.mrb[0].mxu0
    %v620 = vpop.f32.mrb[0].mxu0
    %v621 = vadd.f32 %v412, %v620
    %v622 = vpop.f32.mrb[0].mxu0
    %623 = vmatprep.mubr.bf16.mxu0 0
    %624 = vmatmul.mubr.bf16.gmra.mrb[0].mxu0 %v479
    %v625 = vpop.f32.mrb[0].mxu0
    %v626 = vadd.f32 %v412, %v625
    %v627 = vpop.f32.mrb[0].mxu0
    %v628 = vpop.f32.mrb[0].mxu0
    %v629 = vadd.f32 %v412, %v628
    %v630 = vpop.f32.mrb[0].mxu0
    %631 = vmatprep.mubr.bf16.mxu0 0
    %632 = vmatmul.mubr.bf16.gmra.mrb[0].mxu0 %v482
    %v633 = vpop.f32.mrb[0].mxu0
    %v634 = vadd.f32 %v412, %v633
    %v635 = vpop.f32.mrb[0].mxu0
    %v636 = vpop.f32.mrb[0].mxu0
    %v637 = vadd.f32 %v412, %v636
    %v638 = vpop.f32.mrb[0].mxu0
    %639 = vmatprep.mubr.bf16.mxu0 0
    %640 = vmatmul.mubr.bf16.gmra.mrb[0].mxu0 %v485
    %v641 = vpop.f32.mrb[0].mxu0
    %v642 = vadd.f32 %v412, %v641
    %v643 = vpop.f32.mrb[0].mxu0
    %v644 = vpop.f32.mrb[0].mxu0
    %v645 = vadd.f32 %v412, %v644
    %v646 = vpop.f32.mrb[0].mxu0
    %647 = vdwg.mxu0
    %v648 = vmax.f32 %v522, 0.0
    %v649 = vmax.f32 %v525, 0.0
    %v650 = vmax.f32 %v530, 0.0
    %v651 = vmax.f32 %v533, 0.0
    %v652 = vmax.f32 %v538, 0.0
    %v653 = vmax.f32 %v541, 0.0
    %v654 = vmax.f32 %v546, 0.0
    %v655 = vmax.f32 %v549, 0.0
    %v656 = vmax.f32 %v554, 0.0
    %v657 = vmax.f32 %v557, 0.0
    %v658 = vmax.f32 %v562, 0.0
    %v659 = vmax.f32 %v565, 0.0
    %v660 = vmax.f32 %v570, 0.0
    %v661 = vmax.f32 %v573, 0.0
    %v662 = vmax.f32 %v578, 0.0
    %v663 = vmax.f32 %v581, 0.0
    %v664 = vmax.f32 %v586, 0.0
    %v665 = vmax.f32 %v589, 0.0
    %v666 = vmax.f32 %v594, 0.0
    %v667 = vmax.f32 %v597, 0.0
    %v668 = vmax.f32 %v602, 0.0
    %v669 = vmax.f32 %v605, 0.0
    %v670 = vmax.f32 %v610, 0.0
    %v671 = vmax.f32 %v613, 0.0
    %v672 = vmax.f32 %v618, 0.0
    %v673 = vmax.f32 %v621, 0.0
    %v674 = vmax.f32 %v626, 0.0
    %v675 = vmax.f32 %v629, 0.0
    %v676 = vmax.f32 %v634, 0.0
    %v677 = vmax.f32 %v637, 0.0
    %v678 = vmax.f32 %v642, 0.0
    %v679 = vmax.f32 %v645, 0.0
    %v680 = vld [vmem:[%s5] sm:$0x1]
    %v682 = vlaneseq
    %v683 = vshrl.u32 %v682, 7
    %v684 = vsub.s32 0, %v683
    %v685 = vrot.slane %v680, %v684
    %v687 = vmul.f32 %v648, %v685
    %v688 = vmul.f32 %v649, %v685
    %v689 = vmul.f32 %v650, %v685
    %v690 = vmul.f32 %v651, %v685
    %v691 = vmul.f32 %v652, %v685
    %v692 = vmul.f32 %v653, %v685
    %v693 = vmul.f32 %v654, %v685
    %v694 = vmul.f32 %v655, %v685
    %v695 = vmul.f32 %v656, %v685
    %v696 = vmul.f32 %v657, %v685
    %v697 = vmul.f32 %v658, %v685
    %v698 = vmul.f32 %v659, %v685
    %v699 = vmul.f32 %v660, %v685
    %v700 = vmul.f32 %v661, %v685
    %v701 = vmul.f32 %v662, %v685
    %v702 = vmul.f32 %v663, %v685
    %v703 = vmul.f32 %v664, %v685
    %v704 = vmul.f32 %v665, %v685
    %v705 = vmul.f32 %v666, %v685
    %v706 = vmul.f32 %v667, %v685
    %v707 = vmul.f32 %v668, %v685
    %v708 = vmul.f32 %v669, %v685
    %v709 = vmul.f32 %v670, %v685
    %v710 = vmul.f32 %v671, %v685
    %v711 = vmul.f32 %v672, %v685
    %v712 = vmul.f32 %v673, %v685
    %v713 = vmul.f32 %v674, %v685
    %v714 = vmul.f32 %v675, %v685
    %v715 = vmul.f32 %v676, %v685
    %v716 = vmul.f32 %v677, %v685
    %v717 = vmul.f32 %v678, %v685
    %v718 = vmul.f32 %v679, %v685
    %v719 = vsel %vm438, %v687, 0.0
    %720 = vadd.xlane.f32.xlu0 %v719
    %v721 = vpop.xlane.xlu0 %720
    %v722 = vsel %vm438, %v688, 0.0
    %723 = vadd.xlane.f32.xlu0 %v722
    %v724 = vpop.xlane.xlu0 %723
    %v725 = vsel %vm438, %v689, 0.0
    %726 = vadd.xlane.f32.xlu0 %v725
    %v727 = vpop.xlane.xlu0 %726
    %v728 = vsel %vm438, %v690, 0.0
    %729 = vadd.xlane.f32.xlu0 %v728
    %v730 = vpop.xlane.xlu0 %729
    %v731 = vsel %vm438, %v691, 0.0
    %732 = vadd.xlane.f32.xlu0 %v731
    %v733 = vpop.xlane.xlu0 %732
    %v734 = vsel %vm438, %v692, 0.0
    %735 = vadd.xlane.f32.xlu0 %v734
    %v736 = vpop.xlane.xlu0 %735
    %v737 = vsel %vm438, %v693, 0.0
    %738 = vadd.xlane.f32.xlu0 %v737
    %v739 = vpop.xlane.xlu0 %738
    %v740 = vsel %vm438, %v694, 0.0
    %741 = vadd.xlane.f32.xlu0 %v740
    %v742 = vpop.xlane.xlu0 %741
    %v743 = vsel %vm438, %v695, 0.0
    %744 = vadd.xlane.f32.xlu0 %v743
    %v745 = vpop.xlane.xlu0 %744
    %v746 = vsel %vm438, %v696, 0.0
    %747 = vadd.xlane.f32.xlu0 %v746
    %v748 = vpop.xlane.xlu0 %747
    %v749 = vsel %vm438, %v697, 0.0
    %750 = vadd.xlane.f32.xlu0 %v749
    %v751 = vpop.xlane.xlu0 %750
    %v752 = vsel %vm438, %v698, 0.0
    %753 = vadd.xlane.f32.xlu0 %v752
    %v754 = vpop.xlane.xlu0 %753
    %v755 = vsel %vm438, %v699, 0.0
    %756 = vadd.xlane.f32.xlu0 %v755
    %v757 = vpop.xlane.xlu0 %756
    %v758 = vsel %vm438, %v700, 0.0
    %759 = vadd.xlane.f32.xlu0 %v758
    %v760 = vpop.xlane.xlu0 %759
    %v761 = vsel %vm438, %v701, 0.0
    %762 = vadd.xlane.f32.xlu0 %v761
    %v763 = vpop.xlane.xlu0 %762
    %v764 = vsel %vm438, %v702, 0.0
    %765 = vadd.xlane.f32.xlu0 %v764
    %v766 = vpop.xlane.xlu0 %765
    %v767 = vsel %vm438, %v703, 0.0
    %768 = vadd.xlane.f32.xlu0 %v767
    %v769 = vpop.xlane.xlu0 %768
    %v770 = vsel %vm438, %v704, 0.0
    %771 = vadd.xlane.f32.xlu0 %v770
    %v772 = vpop.xlane.xlu0 %771
    %v773 = vsel %vm438, %v705, 0.0
    %774 = vadd.xlane.f32.xlu0 %v773
    %v775 = vpop.xlane.xlu0 %774
    %v776 = vsel %vm438, %v706, 0.0
    %777 = vadd.xlane.f32.xlu0 %v776
    %v778 = vpop.xlane.xlu0 %777
    %v779 = vsel %vm438, %v707, 0.0
    %780 = vadd.xlane.f32.xlu0 %v779
    %v781 = vpop.xlane.xlu0 %780
    %v782 = vsel %vm438, %v708, 0.0
    %783 = vadd.xlane.f32.xlu0 %v782
    %v784 = vpop.xlane.xlu0 %783
    %v785 = vsel %vm438, %v709, 0.0
    %786 = vadd.xlane.f32.xlu0 %v785
    %v787 = vpop.xlane.xlu0 %786
    %v788 = vsel %vm438, %v710, 0.0
    %789 = vadd.xlane.f32.xlu0 %v788
    %v790 = vpop.xlane.xlu0 %789
    %v791 = vsel %vm438, %v711, 0.0
    %792 = vadd.xlane.f32.xlu0 %v791
    %v793 = vpop.xlane.xlu0 %792
    %v794 = vsel %vm438, %v712, 0.0
    %795 = vadd.xlane.f32.xlu0 %v794
    %v796 = vpop.xlane.xlu0 %795
    %v797 = vsel %vm438, %v713, 0.0
    %798 = vadd.xlane.f32.xlu0 %v797
    %v799 = vpop.xlane.xlu0 %798
    %v800 = vsel %vm438, %v714, 0.0
    %801 = vadd.xlane.f32.xlu0 %v800
    %v802 = vpop.xlane.xlu0 %801
    %v803 = vsel %vm438, %v715, 0.0
    %804 = vadd.xlane.f32.xlu0 %v803
    %v805 = vpop.xlane.xlu0 %804
    %v806 = vsel %vm438, %v716, 0.0
    %807 = vadd.xlane.f32.xlu0 %v806
    %v808 = vpop.xlane.xlu0 %807
    %v809 = vsel %vm438, %v717, 0.0
    %810 = vadd.xlane.f32.xlu0 %v809
    %v811 = vpop.xlane.xlu0 %810
    %v812 = vsel %vm438, %v718, 0.0
    %813 = vadd.xlane.f32.xlu0 %v812
    %v814 = vpop.xlane.xlu0 %813
    %815 = vxpose.xlu0.b32.start [1/16] %v721, 128
    %816 = vxpose.xlu0.b32.cont [2/16] %v724, 128
    %817 = vxpose.xlu0.b32.cont [3/16] %v727, 128
    %818 = vxpose.xlu0.b32.cont [4/16] %v730, 128
    %819 = vxpose.xlu0.b32.cont [5/16] %v733, 128
    %820 = vxpose.xlu0.b32.cont [6/16] %v736, 128
    %821 = vxpose.xlu0.b32.cont [7/16] %v739, 128
    %822 = vxpose.xlu0.b32.cont [8/16] %v742, 128
    %823 = vxpose.xlu0.b32.cont [9/16] %v745, 128
    %824 = vxpose.xlu0.b32.cont [10/16] %v748, 128
    %825 = vxpose.xlu0.b32.cont [11/16] %v751, 128
    %826 = vxpose.xlu0.b32.cont [12/16] %v754, 128
    %827 = vxpose.xlu0.b32.cont [13/16] %v757, 128
    %828 = vxpose.xlu0.b32.cont [14/16] %v760, 128
    %829 = vxpose.xlu0.b32.cont [15/16] %v763, 128
    %830 = vxpose.xlu0.b32.end [16/16] %v766, 128
    %v831 = vpop.trf.xlu0
    %v832 = vpop.trf.xlu0
    %v833 = vpop.trf.xlu0
    %v834 = vpop.trf.xlu0
    %v835 = vpop.trf.xlu0
    %v836 = vpop.trf.xlu0
    %v837 = vpop.trf.xlu0
    %v838 = vpop.trf.xlu0
    %v839 = vpop.trf.xlu0
    %v840 = vpop.trf.xlu0
    %v841 = vpop.trf.xlu0
    %v842 = vpop.trf.xlu0
    %v843 = vpop.trf.xlu0
    %v844 = vpop.trf.xlu0
    %v845 = vpop.trf.xlu0
    %v846 = vpop.trf.xlu0
    %847 = vxpose.xlu0.b32.start [1/16] %v769, 128
    %848 = vxpose.xlu0.b32.cont [2/16] %v772, 128
    %849 = vxpose.xlu0.b32.cont [3/16] %v775, 128
    %850 = vxpose.xlu0.b32.cont [4/16] %v778, 128
    %851 = vxpose.xlu0.b32.cont [5/16] %v781, 128
    %852 = vxpose.xlu0.b32.cont [6/16] %v784, 128
    %853 = vxpose.xlu0.b32.cont [7/16] %v787, 128
    %854 = vxpose.xlu0.b32.cont [8/16] %v790, 128
    %855 = vxpose.xlu0.b32.cont [9/16] %v793, 128
    %856 = vxpose.xlu0.b32.cont [10/16] %v796, 128
    %857 = vxpose.xlu0.b32.cont [11/16] %v799, 128
    %858 = vxpose.xlu0.b32.cont [12/16] %v802, 128
    %859 = vxpose.xlu0.b32.cont [13/16] %v805, 128
    %860 = vxpose.xlu0.b32.cont [14/16] %v808, 128
    %861 = vxpose.xlu0.b32.cont [15/16] %v811, 128
    %862 = vxpose.xlu0.b32.end [16/16] %v814, 128
    %v863 = vpop.trf.xlu0
    %v864 = vpop.trf.xlu0
    %v865 = vpop.trf.xlu0
    %v866 = vpop.trf.xlu0
    %v867 = vpop.trf.xlu0
    %v868 = vpop.trf.xlu0
    %v869 = vpop.trf.xlu0
    %v870 = vpop.trf.xlu0
    %v871 = vpop.trf.xlu0
    %v872 = vpop.trf.xlu0
    %v873 = vpop.trf.xlu0
    %v874 = vpop.trf.xlu0
    %v875 = vpop.trf.xlu0
    %v876 = vpop.trf.xlu0
    %v877 = vpop.trf.xlu0
    %v878 = vpop.trf.xlu0
    %v879 = vld [vmem:[#allocation2] sm:$0x1]
    %881 = vset.pattern.permute.xlu0 0
    %882 = vperm.xlu0 %881, %v879
    %v883 = vpop.permute.xlu0 %882
    %v885 = vlaneseq
    %v886 = vshrl.u32 %v885, 7
    %v887 = vsub.s32 0, %v886
    %v888 = vrot.slane %v883, %v887
    %v889 = vadd.f32 %v831, %v888
    %v890 = vadd.f32 %v863, %v888
    %v893 = vcombine.low %v889, %v890
    %v895 = vunpack.c.l.s4 1966171168
    %v896 = vunpack.c.0.s8 %v895
    %v897 = vlaneseq
    %v898 = vshrl.u32 %v897, 7
    %v899 = vsub.s32 %v896, %v898
    %v900 = vrot.slane %v893, %v899
    %v902 = vunpack.c.l.s4 1966171168
    %v903 = vunpack.c.0.s8 %v902
    %v904 = vlaneseq
    %v905 = vshrl.u32 %v904, 7
    %v906 = vsub.s32 %v903, %v905
    %v907 = vrot.slane %v900, %v906
    %v909 = vlaneseq
    %vm910 = vcmp.ge.s32.totalorder %v909, 0
    %vm911 = vcmp.lt.s32.totalorder %v909, 256
    %vm912 = vmand %vm910, %vm911
    %913 = vst.msk [vmem:[%s7] sm:$0x3] %vm912, %v907
    // Predicated region
    $region42: #{feedforward_regressor.1} parent=1 // pred_check
      _
    $region43: #{feedforward_regressor.1} parent=1 // pred_check_branch
      %915 = sbr.rel (0) target = $region45
    $region44: #{feedforward_regressor.1} parent=1 // pred_region
      _
    $region45: #{feedforward_regressor.1} parent=1 // pred_fallthru
      _
    // Predicated region
    $region46: #{feedforward_regressor.1} parent=1 // pred_check
      _
    $region47: #{feedforward_regressor.1} parent=1 // pred_check_branch
      %917 = sbr.rel (0) target = $region49
    $region48: #{feedforward_regressor.1} parent=1 // pred_region
      _
    $region49: #{feedforward_regressor.1} parent=1 // pred_fallthru
      _
    %918 = vsyncpa [#allocation4], 1
    %919 = vsyncpa [#allocation6], 1

</llo_original>
